<compile_context>
chip_gen: v7x
topology: tpu7x:2x2x1
jax: 0.10.0
libtpu: 0.0.40
codegen_flags: <defaults>
</compile_context>

<pallas_src>
import functools

import jax
import jax.numpy as jnp
from jax.experimental import pallas as pl
from jax.experimental.pallas import tpu as pltpu


def _round_up(x, m):
    return ((x + m - 1) // m) * m


def _apply_gamma(log_pt, pt, gamma):
    """loss = -(1 - pt)**gamma * log_pt, with small-integer gamma as VPU muls."""
    g = float(gamma)
    if g == 0.0:
        return -log_pt
    omp = jnp.maximum(1.0 - pt, 0.0)
    if g.is_integer() and 1.0 <= g <= 4.0:
        w = omp
        for _ in range(int(g) - 1):          # gamma=2 -> one extra VPU mul
            w = w * omp
    else:
        w = omp ** g                         # general (EUP pow)
    return -w * log_pt


# --------------------------------------------------------------------------
# Fast path: HW % 128 == 0.  Block (1, C, R, 128); class axis is a leading
# dim handled by a static unrolled loop over dense (R, 128) slabs.
# --------------------------------------------------------------------------
def _focal_kernel_packed(*refs, c, gamma, rows_valid, r_block, has_alpha):
    if has_alpha:
        a_ref, x_ref, t_ref, out_ref = refs      # a_ref: (C,) f32 in SMEM
    else:
        x_ref, t_ref, out_ref = refs

    j = pl.program_id(1)
    t = t_ref[0, 0]                               # (R, 128) int32

    # pass 1: per-position max over classes (unrolled elementwise maxima)
    m = x_ref[0, 0].astype(jnp.float32)
    for ci in range(1, c):
        m = jnp.maximum(m, x_ref[0, ci].astype(jnp.float32))

    # pass 2: sum of exp + select target logit / target exp / alpha
    s = jnp.zeros_like(m)
    sel_x = jnp.zeros_like(m)
    sel_e = jnp.zeros_like(m)
    at = jnp.zeros_like(m) if has_alpha else None
    for ci in range(c):
        xc = x_ref[0, ci].astype(jnp.float32)
        ec = jnp.exp(xc - m)
        s = s + ec
        hit = t == ci
        sel_x = jnp.where(hit, xc, sel_x)
        sel_e = jnp.where(hit, ec, sel_e)
        if has_alpha:
            at = jnp.where(hit, a_ref[ci], at)    # in-kernel alpha gather

    log_pt = sel_x - (jnp.log(s) + m)
    if has_alpha:
        log_pt = log_pt * at
    pt = sel_e / s                                # reuses exps: no exp(log_pt)

    loss = _apply_gamma(log_pt, pt, gamma)

    # mask rows of a trailing partial block (input there is garbage; select
    # keeps any NaN/inf out of the reduction)
    if rows_valid % r_block != 0:
        row = jax.lax.broadcasted_iota(jnp.int32, loss.shape, 0) + j * r_block
        loss = jnp.where(row < rows_valid, loss, 0.0)

    out_ref[...] = jnp.full(out_ref.shape, jnp.sum(loss), dtype=jnp.float32)


# --------------------------------------------------------------------------
# Fallback path: HW not a multiple of 128.  Class axis on sublanes,
# block (1, C, tile_hw); trailing partial spatial block is masked.
# --------------------------------------------------------------------------
def _focal_kernel_sublane(*refs, c, gamma, hw_valid, tile_hw, has_alpha):
    if has_alpha:
        a_ref, x_ref, t_ref, out_ref = refs
    else:
        x_ref, t_ref, out_ref = refs

    j = pl.program_id(1)
    x = x_ref[0].astype(jnp.float32)              # (C, tile_hw)
    t = t_ref[0]                                  # (1, tile_hw) int32

    cls = jax.lax.broadcasted_iota(jnp.int32, (c, tile_hw), 0)
    onehot = cls == t

    m = jnp.max(x, axis=0, keepdims=True)
    ex = jnp.exp(x - m)
    s = jnp.sum(ex, axis=0, keepdims=True)
    sel_x = jnp.sum(jnp.where(onehot, x, 0.0), axis=0, keepdims=True)
    sel_e = jnp.sum(jnp.where(onehot, ex, 0.0), axis=0, keepdims=True)

    log_pt = sel_x - (jnp.log(s) + m)
    if has_alpha:
        at = jnp.zeros_like(log_pt)
        for ci in range(c):
            at = jnp.where(t == ci, a_ref[ci], at)
        log_pt = log_pt * at
    pt = sel_e / s

    loss = _apply_gamma(log_pt, pt, gamma)

    if hw_valid % tile_hw != 0:
        pos = jax.lax.broadcasted_iota(jnp.int32, loss.shape, 1) + j * tile_hw
        loss = jnp.where(pos < hw_valid, loss, 0.0)

    out_ref[...] = jnp.full(out_ref.shape, jnp.sum(loss), dtype=jnp.float32)


def focal_loss(logits, target, gamma=0.0, alpha=None, size_avg=True,
               target_block_bytes=2 * 1024 * 1024):
    """Pallas implementation of FocalLoss.forward.

    logits: (N, C, *spatial) (NCHW convention) or (M, C).
    target: integer class indices, shape (N, *spatial) or (M,).
    target_block_bytes: logits bytes per block; tune per generation
      (v5e ~0.5-2 MiB, v6e ~4-8 MiB, v7x <=4 MiB).
    """
    if not isinstance(gamma, (int, float)):
        raise TypeError("gamma must be a static Python number")

    if logits.ndim > 2:
        n, c = logits.shape[0], logits.shape[1]
        hw = 1
        for d in logits.shape[2:]:
            hw *= d
        x3 = logits.reshape(n, c, hw)             # free contiguous reshape
    else:
        # (M, C) path: one strided transpose pass over a (typically small)
        # tensor; documented extra traffic.  The main NCHW path never
        # transposes.
        m_rows, c = logits.shape
        x3 = jnp.transpose(logits, (1, 0)).reshape(1, c, m_rows)
        n, hw = 1, m_rows

    t3 = target.reshape(n, 1, hw).astype(jnp.int32)
    n_valid = n * hw
    itemsize = jnp.dtype(logits.dtype).itemsize

    # ---- alpha handling (mirrors the PyTorch branches); consumed in-kernel
    if alpha is None:
        has_alpha = False
        a_vec = None
    else:
        if isinstance(alpha, (float, int)):
            if c != 2:
                raise ValueError(
                    "scalar alpha builds [alpha, 1-alpha]; requires C == 2")
            a_vec = jnp.array([float(alpha), 1.0 - float(alpha)], jnp.float32)
        else:
            a_vec = jnp.asarray(alpha, jnp.float32).reshape(-1)
            if a_vec.shape[0] != c:
                raise ValueError("alpha must have one entry per class")
        has_alpha = True

    # ---- choose layout + tile ----
    if hw % 128 == 0:
        # packed fast path: (n, C, rows, 128), block (1, C, R, 128)
        rows = hw // 128
        x_arr = x3.reshape(n, c, rows, 128)
        t_arr = t3.reshape(n, 1, rows, 128)

        r_target = max(8, (target_block_bytes // (c * 128 * itemsize)) // 8 * 8)
        if n == 1 and rows > 8:
            # v7x: guarantee >= 2 grid steps so both TensorCores get work
            r_target = min(r_target, _round_up(-(-rows // 2), 8))
        if rows <= r_target:
            r_blk = rows if (rows % 8 == 0 or rows < 8) else 8
        else:
            r_blk = r_target
        n_tiles = -(-rows // r_blk)

        kernel = functools.partial(
            _focal_kernel_packed, c=c, gamma=gamma,
            rows_valid=rows, r_block=r_blk, has_alpha=has_alpha)
        in_specs = [
            pl.BlockSpec((1, c, r_blk, 128), lambda b, j, *_: (b, 0, j, 0)),
            pl.BlockSpec((1, 1, r_blk, 128), lambda b, j, *_: (b, 0, j, 0)),
        ]
        data_args = [x_arr, t_arr]
    else:
        # fallback: class axis on sublanes, lane-dense spatial tiles,
        # trailing partial block masked (no jnp.pad).
        if hw <= 128:
            tile_hw = hw
        else:
            tile_hw = max(128,
                          (target_block_bytes // (c * itemsize)) // 128 * 128)
            if n == 1:
                tile_hw = min(tile_hw, max(128, _round_up(-(-hw // 2), 128)))
            tile_hw = min(tile_hw, (hw // 128) * 128)
        n_tiles = -(-hw // tile_hw)

        kernel = functools.partial(
            _focal_kernel_sublane, c=c, gamma=gamma,
            hw_valid=hw, tile_hw=tile_hw, has_alpha=has_alpha)
        in_specs = [
            pl.BlockSpec((1, c, tile_hw), lambda b, j, *_: (b, 0, j)),
            pl.BlockSpec((1, 1, tile_hw), lambda b, j, *_: (b, 0, j)),
        ]
        data_args = [x3, t3]

    out_spec = pl.BlockSpec((1, 1, 1, 128), lambda b, j, *_: (b, j, 0, 0))
    out_shape = jax.ShapeDtypeStruct((n, n_tiles, 1, 128), jnp.float32)

    args = ([a_vec] if has_alpha else []) + data_args
    partials = pl.pallas_call(
        kernel,
        out_shape=out_shape,
        grid_spec=pltpu.PrefetchScalarGridSpec(
            num_scalar_prefetch=1 if has_alpha else 0,
            grid=(n, n_tiles),
            in_specs=in_specs,
            out_specs=out_spec),
        compiler_params=pltpu.CompilerParams(
            dimension_semantics=("parallel", "parallel"),
            vmem_limit_bytes=32 * 1024 * 1024),
    )(*args)

    # every lane of an output block holds the same per-tile partial; lane 0
    total = jnp.sum(partials[:, :, 0, 0])
    if size_avg:
        total = total / jnp.float32(n_valid)
    return total


def _focal_loss_ref(logits, target, gamma=0.0, alpha=None, size_avg=True):
    """Pure-JAX reference matching the PyTorch module."""
    if logits.ndim > 2:
        n, c = logits.shape[0], logits.shape[1]
        x = jnp.transpose(logits.reshape(n, c, -1), (0, 2, 1)).reshape(-1, c)
    else:
        x = logits
        c = x.shape[1]
    t = target.reshape(-1)
    logp = jax.nn.log_softmax(x.astype(jnp.float32), axis=1)
    log_pt = jnp.take_along_axis(logp, t[:, None], axis=1)[:, 0]
    pt = jnp.exp(log_pt)
    if alpha is not None:
        if isinstance(alpha, (float, int)):
            a = jnp.array([float(alpha), 1.0 - float(alpha)], jnp.float32)
        else:
            a = jnp.asarray(alpha, jnp.float32)
        log_pt = log_pt * a[t]
    loss = -((1.0 - pt) ** gamma) * log_pt if gamma != 0 else -log_pt
    return loss.mean() if size_avg else loss.sum()


if __name__ == "__main__":
    key = jax.random.PRNGKey(0)
    k1, k2, k3, k4, k5, k6 = jax.random.split(key, 6)

    # case 1: NCHW, HW % 128 == 0 (packed fast path), gamma=2, no alpha, mean
    N, C, H, W = 2, 4, 16, 16
    logits = jax.random.normal(k1, (N, C, H, W), dtype=jnp.float32)
    target = jax.random.randint(k2, (N, H, W), 0, C, dtype=jnp.int32)
    out = focal_loss(logits, target, gamma=2.0, alpha=None, size_avg=True)
    jax.block_until_ready(out)
    ref = _focal_loss_ref(logits, target, gamma=2.0, alpha=None, size_avg=True)
    assert jnp.allclose(out, ref, rtol=1e-4, atol=1e-5), (out, ref)

    # case 2: per-class alpha (in-kernel SMEM gather), sum reduction
    alpha = [0.25, 0.30, 0.20, 0.25]
    out = focal_loss(logits, target, gamma=2.0, alpha=alpha, size_avg=False)
    jax.block_until_ready(out)
    ref = _focal_loss_ref(logits, target, gamma=2.0, alpha=alpha, size_avg=False)
    assert jnp.allclose(out, ref, rtol=1e-4, atol=1e-4), (out, ref)

    # case 3: HW not a multiple of 128 -> sublane fallback, partial tail tile
    H2, W2 = 15, 15
    logits3 = jax.random.normal(k3, (N, C, H2, W2), dtype=jnp.float32)
    target3 = jax.random.randint(k4, (N, H2, W2), 0, C, dtype=jnp.int32)
    out = focal_loss(logits3, target3, gamma=2.0, alpha=alpha, size_avg=True)
    jax.block_until_ready(out)
    ref = _focal_loss_ref(logits3, target3, gamma=2.0, alpha=alpha,
                          size_avg=True)
    assert jnp.allclose(out, ref, rtol=1e-4, atol=1e-5), (out, ref)

    # case 4: plain (M, C) input, gamma=0, no alpha, sum
    M = 300
    logits4 = jax.random.normal(k5, (M, C), dtype=jnp.float32)
    target4 = jax.random.randint(k6, (M,), 0, C, dtype=jnp.int32)
    out = focal_loss(logits4, target4, gamma=0.0, alpha=None, size_avg=False)
    jax.block_until_ready(out)
    ref = _focal_loss_ref(logits4, target4, gamma=0.0, alpha=None,
                          size_avg=False)
    assert jnp.allclose(out, ref, rtol=1e-4, atol=1e-4), (out, ref)

    # case 5: scalar alpha (binary, C == 2), gamma=1, mean
    logits5 = jax.random.normal(k1, (N, 2, H, W), dtype=jnp.float32)
    target5 = jax.random.randint(k2, (N, H, W), 0, 2, dtype=jnp.int32)
    out = focal_loss(logits5, target5, gamma=1.0, alpha=0.25, size_avg=True)
    jax.block_until_ready(out)
    ref = _focal_loss_ref(logits5, target5, gamma=1.0, alpha=0.25,
                          size_avg=True)
    assert jnp.allclose(out, ref, rtol=1e-4, atol=1e-5), (out, ref)

    print("KERNEL_OK")
</pallas_src>

<mosaic_0001>
module attributes {stable_mosaic.version = 11 : i64} {
  func.func @_focal_kernel_packed(%arg0: i32, %arg1: i32, %arg2: memref<1x4x2x128xf32, #tpu.memory_space<vmem>>, %arg3: memref<1x1x2x128xi32, #tpu.memory_space<vmem>>, %arg4: memref<1x1x1x128xf32, #tpu.memory_space<vmem>>) attributes {dimension_semantics = [#tpu.dimension_semantics<parallel>, #tpu.dimension_semantics<parallel>], iteration_bounds = array<i64: 2, 1>, scalar_prefetch = 0 : i64, scratch_operands = 0 : i64, tpu.core_type = #tpu.core_type<tc>, window_params = [{transform_indices = @transform_0, window_bounds = array<i64: 1, 4, 2, 128>}, {transform_indices = @transform_1, window_bounds = array<i64: 1, 1, 2, 128>}, {transform_indices = @transform_2, window_bounds = array<i64: 1, 1, 1, 128>}]} {
    %c0 = arith.constant 0 : index
    %c0_0 = arith.constant 0 : index
    %c0_1 = arith.constant 0 : index
    %c0_2 = arith.constant 0 : index
    %0 = vector.load %arg3[%c0, %c0_0, %c0_1, %c0_2] : memref<1x1x2x128xi32, #tpu.memory_space<vmem>>, vector<1x1x2x128xi32>
    %1 = vector.shape_cast %0 : vector<1x1x2x128xi32> to vector<2x128xi32>
    %c0_3 = arith.constant 0 : index
    %c0_4 = arith.constant 0 : index
    %c0_5 = arith.constant 0 : index
    %c0_6 = arith.constant 0 : index
    %2 = vector.load %arg2[%c0_3, %c0_4, %c0_5, %c0_6] : memref<1x4x2x128xf32, #tpu.memory_space<vmem>>, vector<1x1x2x128xf32>
    %3 = vector.shape_cast %2 : vector<1x1x2x128xf32> to vector<2x128xf32>
    %c0_7 = arith.constant 0 : index
    %c1 = arith.constant 1 : index
    %c0_8 = arith.constant 0 : index
    %c0_9 = arith.constant 0 : index
    %4 = vector.load %arg2[%c0_7, %c1, %c0_8, %c0_9] : memref<1x4x2x128xf32, #tpu.memory_space<vmem>>, vector<1x1x2x128xf32>
    %5 = vector.shape_cast %4 : vector<1x1x2x128xf32> to vector<2x128xf32>
    %6 = arith.maximumf %3, %5 : vector<2x128xf32>
    %c0_10 = arith.constant 0 : index
    %c2 = arith.constant 2 : index
    %c0_11 = arith.constant 0 : index
    %c0_12 = arith.constant 0 : index
    %7 = vector.load %arg2[%c0_10, %c2, %c0_11, %c0_12] : memref<1x4x2x128xf32, #tpu.memory_space<vmem>>, vector<1x1x2x128xf32>
    %8 = vector.shape_cast %7 : vector<1x1x2x128xf32> to vector<2x128xf32>
    %9 = arith.maximumf %6, %8 : vector<2x128xf32>
    %c0_13 = arith.constant 0 : index
    %c3 = arith.constant 3 : index
    %c0_14 = arith.constant 0 : index
    %c0_15 = arith.constant 0 : index
    %10 = vector.load %arg2[%c0_13, %c3, %c0_14, %c0_15] : memref<1x4x2x128xf32, #tpu.memory_space<vmem>>, vector<1x1x2x128xf32>
    %11 = vector.shape_cast %10 : vector<1x1x2x128xf32> to vector<2x128xf32>
    %12 = arith.maximumf %9, %11 : vector<2x128xf32>
    %cst = arith.constant 0.000000e+00 : f32
    %13 = vector.broadcast %cst : f32 to vector<2x128xf32>
    %cst_16 = arith.constant 0.000000e+00 : f32
    %14 = vector.broadcast %cst_16 : f32 to vector<2x128xf32>
    %cst_17 = arith.constant 0.000000e+00 : f32
    %15 = vector.broadcast %cst_17 : f32 to vector<2x128xf32>
    %c0_18 = arith.constant 0 : index
    %c0_19 = arith.constant 0 : index
    %c0_20 = arith.constant 0 : index
    %c0_21 = arith.constant 0 : index
    %16 = vector.load %arg2[%c0_18, %c0_19, %c0_20, %c0_21] : memref<1x4x2x128xf32, #tpu.memory_space<vmem>>, vector<1x1x2x128xf32>
    %17 = vector.shape_cast %16 : vector<1x1x2x128xf32> to vector<2x128xf32>
    %18 = arith.subf %17, %12 : vector<2x128xf32>
    %19 = math.exp %18 : vector<2x128xf32>
    %20 = arith.addf %13, %19 : vector<2x128xf32>
    %c0_i32 = arith.constant 0 : i32
    %21 = vector.broadcast %c0_i32 : i32 to vector<2x128xi32>
    %22 = arith.cmpi eq, %1, %21 : vector<2x128xi32>
    %23 = arith.select %22, %17, %14 : vector<2x128xi1>, vector<2x128xf32>
    %24 = arith.select %22, %19, %15 : vector<2x128xi1>, vector<2x128xf32>
    %c0_22 = arith.constant 0 : index
    %c1_23 = arith.constant 1 : index
    %c0_24 = arith.constant 0 : index
    %c0_25 = arith.constant 0 : index
    %25 = vector.load %arg2[%c0_22, %c1_23, %c0_24, %c0_25] : memref<1x4x2x128xf32, #tpu.memory_space<vmem>>, vector<1x1x2x128xf32>
    %26 = vector.shape_cast %25 : vector<1x1x2x128xf32> to vector<2x128xf32>
    %27 = arith.subf %26, %12 : vector<2x128xf32>
    %28 = math.exp %27 : vector<2x128xf32>
    %29 = arith.addf %20, %28 : vector<2x128xf32>
    %c1_i32 = arith.constant 1 : i32
    %30 = vector.broadcast %c1_i32 : i32 to vector<2x128xi32>
    %31 = arith.cmpi eq, %1, %30 : vector<2x128xi32>
    %32 = arith.select %31, %26, %23 : vector<2x128xi1>, vector<2x128xf32>
    %33 = arith.select %31, %28, %24 : vector<2x128xi1>, vector<2x128xf32>
    %c0_26 = arith.constant 0 : index
    %c2_27 = arith.constant 2 : index
    %c0_28 = arith.constant 0 : index
    %c0_29 = arith.constant 0 : index
    %34 = vector.load %arg2[%c0_26, %c2_27, %c0_28, %c0_29] : memref<1x4x2x128xf32, #tpu.memory_space<vmem>>, vector<1x1x2x128xf32>
    %35 = vector.shape_cast %34 : vector<1x1x2x128xf32> to vector<2x128xf32>
    %36 = arith.subf %35, %12 : vector<2x128xf32>
    %37 = math.exp %36 : vector<2x128xf32>
    %38 = arith.addf %29, %37 : vector<2x128xf32>
    %c2_i32 = arith.constant 2 : i32
    %39 = vector.broadcast %c2_i32 : i32 to vector<2x128xi32>
    %40 = arith.cmpi eq, %1, %39 : vector<2x128xi32>
    %41 = arith.select %40, %35, %32 : vector<2x128xi1>, vector<2x128xf32>
    %42 = arith.select %40, %37, %33 : vector<2x128xi1>, vector<2x128xf32>
    %c0_30 = arith.constant 0 : index
    %c3_31 = arith.constant 3 : index
    %c0_32 = arith.constant 0 : index
    %c0_33 = arith.constant 0 : index
    %43 = vector.load %arg2[%c0_30, %c3_31, %c0_32, %c0_33] : memref<1x4x2x128xf32, #tpu.memory_space<vmem>>, vector<1x1x2x128xf32>
    %44 = vector.shape_cast %43 : vector<1x1x2x128xf32> to vector<2x128xf32>
    %45 = arith.subf %44, %12 : vector<2x128xf32>
    %46 = math.exp %45 : vector<2x128xf32>
    %47 = arith.addf %38, %46 : vector<2x128xf32>
    %c3_i32 = arith.constant 3 : i32
    %48 = vector.broadcast %c3_i32 : i32 to vector<2x128xi32>
    %49 = arith.cmpi eq, %1, %48 : vector<2x128xi32>
    %50 = arith.select %49, %44, %41 : vector<2x128xi1>, vector<2x128xf32>
    %51 = arith.select %49, %46, %42 : vector<2x128xi1>, vector<2x128xf32>
    %52 = math.log %47 : vector<2x128xf32>
    %53 = arith.addf %52, %12 : vector<2x128xf32>
    %54 = arith.subf %50, %53 : vector<2x128xf32>
    %55 = arith.divf %51, %47 : vector<2x128xf32>
    %cst_34 = arith.constant 1.000000e+00 : f32
    %56 = vector.broadcast %cst_34 : f32 to vector<2x128xf32>
    %57 = arith.subf %56, %55 : vector<2x128xf32>
    %cst_35 = arith.constant 0.000000e+00 : f32
    %58 = vector.broadcast %cst_35 : f32 to vector<2x128xf32>
    %59 = arith.maximumf %57, %58 : vector<2x128xf32>
    %60 = arith.mulf %59, %59 : vector<2x128xf32>
    %cst_36 = arith.constant 0.000000e+00 : f32
    %61 = vector.broadcast %cst_36 : f32 to vector<2x128xf32>
    %62 = arith.subf %61, %60 : vector<2x128xf32>
    %63 = arith.mulf %62, %54 : vector<2x128xf32>
    %64 = vector.shape_cast %63 : vector<2x128xf32> to vector<1x2x128xf32>
    %cst_37 = arith.constant dense<0.000000e+00> : vector<1xf32>
    %65 = vector.multi_reduction <add>, %64, %cst_37 [1, 2] : vector<1x2x128xf32> to vector<1xf32>
    %66 = vector.shape_cast %65 : vector<1xf32> to vector<1x1x1xf32>
    %67 = vector.extract %66[0, 0, 0] : f32 from vector<1x1x1xf32>
    %68 = vector.broadcast %67 : f32 to vector<1x1x1x128xf32>
    %c0_38 = arith.constant 0 : index
    %c0_39 = arith.constant 0 : index
    %c0_40 = arith.constant 0 : index
    %c0_41 = arith.constant 0 : index
    %69 = vector.load %arg4[%c0_38, %c0_39, %c0_40, %c0_41] : memref<1x1x1x128xf32, #tpu.memory_space<vmem>>, vector<1x1x1x128xf32>
    tpu.vector_store %arg4[%c0_38, %c0_39, %c0_40, %c0_41], %68 {strides = array<i32>} : memref<1x1x1x128xf32, #tpu.memory_space<vmem>>, vector<1x1x1x128xf32>,
    return
  }
  func.func @transform_0(%arg0: i32, %arg1: i32) -> (i32, i32, i32, i32) {
    %c0_i32 = arith.constant 0 : i32
    %c0_i32_0 = arith.constant 0 : i32
    %c0_i32_1 = arith.constant 0 : i32
    return %arg0, %c0_i32, %arg1, %c0_i32_0 : i32, i32, i32, i32
  }
  func.func @transform_1(%arg0: i32, %arg1: i32) -> (i32, i32, i32, i32) {
    %c0_i32 = arith.constant 0 : i32
    %c0_i32_0 = arith.constant 0 : i32
    %c0_i32_1 = arith.constant 0 : i32
    return %arg0, %c0_i32, %arg1, %c0_i32_0 : i32, i32, i32, i32
  }
  func.func @transform_2(%arg0: i32, %arg1: i32) -> (i32, i32, i32, i32) {
    %c0_i32 = arith.constant 0 : i32
    %c0_i32_0 = arith.constant 0 : i32
    %c0_i32_1 = arith.constant 0 : i32
    return %arg0, %arg1, %c0_i32, %c0_i32_0 : i32, i32, i32, i32
  }
}

</mosaic_0001>

<llo_original>
// kernel: tpu_custom_call.1
$region0: #{tpu_custom_call.1}
  #allocation0 [shape = 'u32[]', space=smem, size = 0x4, offset = 0x4, fixed_abs, tag = 'smem constant byte address 0x4 - core index']
  #allocation1 [shape = 'u32[144,128]{1,0:T(1,128)}', space=vmem, size = 0x12000, scoped, tag = 'internal scratch']
  %s0 = inlined_call_operand.hbm [shape: f32[2,4,2,128], index: 0, kind: input, shape index: {}]
  %s1 = inlined_call_operand.hbm [shape: s32[2,1,2,128], index: 1, kind: input, shape index: {}]
  %s2 = inlined_call_operand.hbm [shape: f32[2,1,1,128], index: 2, kind: output, shape index: {}]
  %s3 = sld [smem:[#allocation0]]
  $region49: #{tpu_custom_call.1} parent=0
    _
  %s5 = ssub.s32 1, %s3
  %s6 = scalar_select 0, %s5, %s3
  $region1: #{tpu_custom_call.1} parent=0
    #allocation2 [shape = 'u8[8192]{0}', space=vmem, size = 0x2000, scoped, tag = 'input window, operand 0']
    #allocation3 [shape = 's32[2]{0}', space=sflag, size = 0x8, scoped, tag = 'scoped memory for tpu_custom_call.1']
    #allocation4 [shape = 's32[2]{0}', space=sflag, size = 0x8, scoped, tag = 'scoped memory for tpu_custom_call.1']
    #allocation5 [shape = 'u8[2048]{0}', space=vmem, size = 0x800, scoped, tag = 'input window, operand 1']
    #allocation6 [shape = 's32[2]{0}', space=sflag, size = 0x8, scoped, tag = 'scoped memory for tpu_custom_call.1']
    #allocation7 [shape = 'u8[1024]{0}', space=vmem, size = 0x400, scoped, tag = 'output window, operand 0']
    %7 = vsyncpa [#allocation3], 0
    %s8 = scalar_lea.sflag [#allocation3], 1
    %9 = vsyncpa %s8, 0
    %10 = vsyncpa [#allocation6], 0
    %s11 = scalar_lea.sflag [#allocation6], 1
    %12 = vsyncpa %s11, 0
    %13 = vsyncpa [#allocation4], 0
    %s14 = scalar_lea.sflag [#allocation4], 1
    %15 = vsyncpa %s14, 0
    loop: start=0, step=1, limit=4
    $region2: #{tpu_custom_call.1} parent=1 // loop_pre_header
      _
    $region3: #{tpu_custom_call.1} parent=1 // loop_header
      %s17 = sphi 0, %s21
      %p18 = scmp.ge.s32.totalorder %s17, 4
      %s24 = sphi 0, %s36
      %s25 = sphi 0, %s32
      %s26 = sphi 0, %s24
      %s27 = sphi 0, %s25
      %s28 = sphi 0, %s26
      %s29 = sphi 0, %s27
      %s41 = sphi 0, %s43
      %s44 = sphi 0, %s41
      %s45 = sphi 0, %s44
      %s61 = sphi 0, %s45
      %s69 = sphi 0, %s71
      %s72 = sphi 0, %s69
      %s73 = sphi 0, %s72
      %s89 = sphi 0, %s73
      %s97 = sphi 0, %s99
      %s100 = sphi 0, %s97
      %s101 = sphi 0, %s100
      %s117 = sphi 0, %s101
    $region4: #{tpu_custom_call.1} parent=1 // loop_header_branch
      %20 = sbr.rel (%p18) target = $region8
    $region5: #{tpu_custom_call.1} parent=1 // loop_body
      %s22 = ssub.s32 %s17, 1
      %s23 = ssub.s32 %s17, 2
      %s30 = sadd.s32 1, %s25
      %p31 = scmp.ge.s32.totalorder %s30, 1
      %s32 = scalar_select %p31, 0, %s30
      %s33 = sadd.s32 1, %s24
      %s34 = scalar_select %p31, %s33, %s24
      %p35 = scmp.ge.s32.totalorder %s34, 2
      %s36 = scalar_select %p35, 0, %s34
      %s37 = ssub.s32 %s24, %s36
      %s38 = ssub.s32 %s25, %s32
      %s39 = sor.u32 %s37, %s38
      %p40 = scmp.eq.s32.totalorder %s39, 0
      %s42 = sadd.s32 %s41, 1
      %s43 = scalar_select %p40, %s41, %s42
      %p46 = pneg %p40
      %p47 = scmp.eq.s32.totalorder %s17, 1
      %p48 = por %p46, %p47
      %p49 = scmp.ne.s32.totalorder %s41, %s44
      %p50 = scmp.eq.s32.totalorder %s17, 0
      %p51 = por %p49, %p50
      %p52 = scmp.ne.s32.totalorder %s41, %s44
      %p53 = scmp.eq.s32.totalorder %s22, 1
      %p54 = por %p52, %p53
      %p55 = scmp.ne.s32.totalorder %s44, %s45
      %p56 = scmp.eq.s32.totalorder %s22, 0
      %p57 = por %p55, %p56
      %p58 = scmp.ne.s32.totalorder %s44, %s45
      %p59 = scmp.eq.s32.totalorder %s23, 1
      %p60 = por %p58, %p59
      %p62 = scmp.ne.s32.totalorder %s45, %s61
      %p63 = scmp.eq.s32.totalorder %s23, 0
      %p64 = por %p62, %p63
      %s65 = ssub.s32 %s24, %s36
      %s66 = ssub.s32 %s25, %s32
      %s67 = sor.u32 %s65, %s66
      %p68 = scmp.eq.s32.totalorder %s67, 0
      %s70 = sadd.s32 %s69, 1
      %s71 = scalar_select %p68, %s69, %s70
      %p74 = pneg %p68
      %p75 = scmp.eq.s32.totalorder %s17, 1
      %p76 = por %p74, %p75
      %p77 = scmp.ne.s32.totalorder %s69, %s72
      %p78 = scmp.eq.s32.totalorder %s17, 0
      %p79 = por %p77, %p78
      %p80 = scmp.ne.s32.totalorder %s69, %s72
      %p81 = scmp.eq.s32.totalorder %s22, 1
      %p82 = por %p80, %p81
      %p83 = scmp.ne.s32.totalorder %s72, %s73
      %p84 = scmp.eq.s32.totalorder %s22, 0
      %p85 = por %p83, %p84
      %p86 = scmp.ne.s32.totalorder %s72, %s73
      %p87 = scmp.eq.s32.totalorder %s23, 1
      %p88 = por %p86, %p87
      %p90 = scmp.ne.s32.totalorder %s73, %s89
      %p91 = scmp.eq.s32.totalorder %s23, 0
      %p92 = por %p90, %p91
      %s93 = ssub.s32 %s24, %s36
      %s94 = ssub.s32 %s25, %s32
      %s95 = sor.u32 %s93, %s94
      %p96 = scmp.eq.s32.totalorder %s95, 0
      %s98 = sadd.s32 %s97, 1
      %s99 = scalar_select %p96, %s97, %s98
      %p102 = pneg %p96
      %p103 = scmp.eq.s32.totalorder %s17, 1
      %p104 = por %p102, %p103
      %p105 = scmp.ne.s32.totalorder %s97, %s100
      %p106 = scmp.eq.s32.totalorder %s17, 0
      %p107 = por %p105, %p106
      %p108 = scmp.ne.s32.totalorder %s97, %s100
      %p109 = scmp.eq.s32.totalorder %s22, 1
      %p110 = por %p108, %p109
      %p111 = scmp.ne.s32.totalorder %s100, %s101
      %p112 = scmp.eq.s32.totalorder %s22, 0
      %p113 = por %p111, %p112
      %p114 = scmp.ne.s32.totalorder %s100, %s101
      %p115 = scmp.eq.s32.totalorder %s23, 1
      %p116 = por %p114, %p115
      %p118 = scmp.ne.s32.totalorder %s101, %s117
      %p119 = scmp.eq.s32.totalorder %s23, 0
      %p120 = por %p118, %p119
      %p121 = scmp.le.s32.totalorder 1, %s17
      %p122 = scmp.lt.s32.totalorder %s17, 3
      %p123 = pnand %p121, %p122
      %p124 = pneg %p123
      // Predicated region
      $region9: #{tpu_custom_call.1} parent=5 // pred_check
        _
      $region10: #{tpu_custom_call.1} parent=5 // pred_check_branch
        %126 = sbr.rel (%p123) target = $region12
      $region11: #{tpu_custom_call.1} parent=5 // pred_region
        %s127 = ssub.s32 %s17, 1
      $region12: #{tpu_custom_call.1} parent=5 // pred_fallthru
        _
      %p128 = scmp.lt.s32.totalorder %s17, 2
      // Predicated region
      $region13: #{tpu_custom_call.1} parent=5 // pred_check
        %p129 = pneg %p128
      $region14: #{tpu_custom_call.1} parent=5 // pred_check_branch
        %131 = sbr.rel (%p129) target = $region16
      $region15: #{tpu_custom_call.1} parent=5 // pred_region
        // Predicated region
        $region17: #{tpu_custom_call.1} parent=15 // pred_check
          %p132 = pneg %p51
        $region18: #{tpu_custom_call.1} parent=15 // pred_check_branch
          %134 = sbr.rel (%p132) target = $region20
        $region19: #{tpu_custom_call.1} parent=15 // pred_region
          %s135 = sand.u32 %s41, 1
          %s136 = scalar_lea.sflag [#allocation3], %s135
          %s137 = sand.u32 %s41, 1
          %s138 = smul.addr %s137, 8
          %s139 = scalar_lea.vmem [#allocation2], %s138
          %s141 = ssub.s32 128, 128
          %142 = vsyncadd %s136, %s141
          %s143 = smul.addr %s24, 4
          %s144 = sadd.s32 %s25, %s143
          %s145 = smul.addr %s144, 32
          %s146 = scalar_lea.hbm %s0, %s145
          %s147 = sshll.u32 %s139, 4
          %s148 = int_to_ptr.vmem [resolvable:$true] %s147
          %153 = dma.hbm_to_vmem [thread:$0]  %s146, 128, %s148, %s136, 32, 32, 2
        $region20: #{tpu_custom_call.1} parent=15 // pred_fallthru
          _
        // Predicated region
        $region21: #{tpu_custom_call.1} parent=15 // pred_check
          %p154 = pneg %p79
        $region22: #{tpu_custom_call.1} parent=15 // pred_check_branch
          %156 = sbr.rel (%p154) target = $region24
        $region23: #{tpu_custom_call.1} parent=15 // pred_region
          %s157 = sand.u32 %s69, 1
          %s158 = scalar_lea.sflag [#allocation6], %s157
          %s159 = sand.u32 %s69, 1
          %s160 = smul.addr %s159, 2
          %s161 = scalar_lea.vmem [#allocation5], %s160
          %s163 = ssub.s32 32, 32
          %164 = vsyncadd %s158, %s163
          %s165 = sadd.s32 %s25, %s24
          %s166 = smul.addr %s165, 32
          %s167 = scalar_lea.hbm %s1, %s166
          %s169 = sshll.u32 %s161, 4
          %s170 = int_to_ptr.vmem [resolvable:$true] %s169
          %172 = dma.hbm_to_vmem [thread:$0]  %s167, 32, %s170, %s158
        $region24: #{tpu_custom_call.1} parent=15 // pred_fallthru
          _
      $region16: #{tpu_custom_call.1} parent=5 // pred_fallthru
        _
      %p173 = scmp.le.s32.totalorder 1, %s17
      %p174 = scmp.lt.s32.totalorder %s17, 3
      %p175 = pnand %p173, %p174
      %p176 = pneg %p175
      // Predicated region
      $region25: #{tpu_custom_call.1} parent=5 // pred_check
        _
      $region26: #{tpu_custom_call.1} parent=5 // pred_check_branch
        %178 = sbr.rel (%p175) target = $region28
      $region27: #{tpu_custom_call.1} parent=5 // pred_region
        %s179 = ssub.s32 %s17, 1
        %s180 = sand.u32 %s44, 1
        %s181 = scalar_lea.sflag [#allocation3], %s180
        %s182 = sand.u32 %s44, 1
        %s183 = smul.addr %s182, 8
        %s184 = scalar_lea.vmem [#allocation2], %s183
        // Predicated region
        $region29: #{tpu_custom_call.1} parent=27 // pred_check
          %p185 = pneg %p57
        $region30: #{tpu_custom_call.1} parent=27 // pred_check_branch
          %187 = sbr.rel (%p185) target = $region32
        $region31: #{tpu_custom_call.1} parent=27 // pred_region
          %188 = dma.done %s181, 128
        $region32: #{tpu_custom_call.1} parent=27 // pred_fallthru
          _
        %s189 = sand.u32 %s72, 1
        %s190 = scalar_lea.sflag [#allocation6], %s189
        %s191 = sand.u32 %s72, 1
        %s192 = smul.addr %s191, 2
        %s193 = scalar_lea.vmem [#allocation5], %s192
        // Predicated region
        $region33: #{tpu_custom_call.1} parent=27 // pred_check
          %p194 = pneg %p85
        $region34: #{tpu_custom_call.1} parent=27 // pred_check_branch
          %196 = sbr.rel (%p194) target = $region36
        $region35: #{tpu_custom_call.1} parent=27 // pred_region
          %197 = dma.done %s190, 32
        $region36: #{tpu_custom_call.1} parent=27 // pred_fallthru
          _
        %s198 = sand.u32 %s44, 1
        %s199 = scalar_lea.sflag [#allocation3], %s198
        %s200 = sand.u32 %s44, 1
        %s201 = smul.addr %s200, 8
        %s202 = scalar_lea.vmem [#allocation2], %s201
        %p203 = pneg %p57
        %p204 = pneg %p54
        %s205 = sand.u32 %s72, 1
        %s206 = scalar_lea.sflag [#allocation6], %s205
        %s207 = sand.u32 %s72, 1
        %s208 = smul.addr %s207, 2
        %s209 = scalar_lea.vmem [#allocation5], %s208
        %p210 = pneg %p85
        %p211 = pneg %p82
        %p212 = pneg %p113
        %p213 = pneg %p110
        %s214 = sand.u32 %s100, 1
        %s215 = scalar_lea.sflag [#allocation4], %s214
        %s216 = sand.u32 %s100, 1
        %s217 = scalar_lea.vmem [#allocation7], %s216
        %v218 = vld [vmem:[%s193] sm:$0x3]
        %v219 = vld [vmem:[%s184] sm:$0x3]
        %s220 = scalar_lea.vmem %s184, 2 [#allocation2]
        %v221 = vld [vmem:[%s220] sm:$0x3]
        %v222 = vmax.f32 %v219, %v221
        %s223 = scalar_lea.vmem %s184, 4 [#allocation2]
        %v224 = vld [vmem:[%s223] sm:$0x3]
        %v225 = vmax.f32 %v222, %v224
        %s226 = scalar_lea.vmem %s184, 6 [#allocation2]
        %v227 = vld [vmem:[%s226] sm:$0x3]
        %v228 = vmax.f32 %v225, %v227
        %v229 = vsub.f32 %v219, %v228
        %v230 = vmul.f32 %v229, 1.442695
        %v231 = vpow.pop %v230
        %v232 = vadd.f32 %v231, 0.0
        %vm233 = vcmp.eq.s32.totalorder %v218, 0
        %v234 = vsel %vm233, %v219, 0.0
        %v235 = vsel %vm233, %v231, 0.0
        %v236 = vsub.f32 %v221, %v228
        %v237 = vmul.f32 %v236, 1.442695
        %v238 = vpow.pop %v237
        %v239 = vadd.f32 %v232, %v238
        %vm240 = vcmp.eq.s32.totalorder %v218, 1
        %v241 = vsel %vm240, %v221, %v234
        %v242 = vsel %vm240, %v238, %v235
        %v243 = vsub.f32 %v224, %v228
        %v244 = vmul.f32 %v243, 1.442695
        %v245 = vpow.pop %v244
        %v246 = vadd.f32 %v239, %v245
        %vm247 = vcmp.eq.s32.totalorder %v218, 2
        %v248 = vsel %vm247, %v224, %v241
        %v249 = vsel %vm247, %v245, %v242
        %v250 = vsub.f32 %v227, %v228
        %v251 = vmul.f32 %v250, 1.442695
        %v252 = vpow.pop %v251
        %v253 = vadd.f32 %v246, %v252
        %vm254 = vcmp.eq.s32.totalorder %v218, 3
        %v255 = vsel %vm254, %v227, %v248
        %v256 = vsel %vm254, %v252, %v249
        %v257 = vlog2.pop %v253
        %v258 = vmul.f32 %v257, 0.6931472
        %v259 = vadd.f32 %v258, %v228
        %v260 = vsub.f32 %v255, %v259
        %v261 = vrcp.pop %v253
        %v262 = vmul.f32 %v256, %v261
        %v263 = vsub.f32 1.0, %v262
        %v264 = vmax.f32 %v263, 0.0
        %v265 = vmul.f32 %v264, %v264
        %v266 = vsub.f32 0.0, %v265
        %v267 = vmul.f32 %v266, %v260
        %vm268 = vcmask 1041408
        %v269 = vsel %vm268, %v267, 0.0
        %270 = vadd.xlane.f32.xlu0 %v269
        %v271 = vpop.xlane.xlu0 %270
        %v272 = vrot.slane %v271, 4
        %v273 = vadd.f32 %v271, %v272
        %v274 = vrot.slane %v273, 2
        %v275 = vadd.f32 %v273, %v274
        %v276 = vrot.slane %v275, 1
        %v277 = vadd.f32 %v275, %v276
        %s278 = vtos %v277
        %v279 = vstv %s278
        %280 = vst [vmem:[%s217] sm:$0x1] %v279
        %s281 = sand.u32 %s100, 1
        %s282 = scalar_lea.sflag [#allocation4], %s281
        %s283 = sand.u32 %s100, 1
        %s284 = scalar_lea.vmem [#allocation7], %s283
        // Predicated region
        $region37: #{tpu_custom_call.1} parent=27 // pred_check
          %p285 = pneg %p110
        $region38: #{tpu_custom_call.1} parent=27 // pred_check_branch
          %287 = sbr.rel (%p285) target = $region40
        $region39: #{tpu_custom_call.1} parent=27 // pred_region
          %s289 = ssub.s32 16, 16
          %290 = vsyncadd %s282, %s289
          %s291 = sadd.s32 %s27, %s26
          %s292 = smul.addr %s291, 16
          %s293 = scalar_lea.hbm %s2, %s292
          %s295 = sshll.u32 %s284, 4
          %s296 = int_to_ptr.vmem [resolvable:$true] %s295
          %298 = dma.vmem_to_hbm [thread:$0]  %s296, 16, %s293, %s282
        $region40: #{tpu_custom_call.1} parent=27 // pred_fallthru
          _
      $region28: #{tpu_custom_call.1} parent=5 // pred_fallthru
        _
      %p299 = scmp.le.s32.totalorder 2, %s17
      // Predicated region
      $region41: #{tpu_custom_call.1} parent=5 // pred_check
        %p300 = pneg %p299
      $region42: #{tpu_custom_call.1} parent=5 // pred_check_branch
        %302 = sbr.rel (%p300) target = $region44
      $region43: #{tpu_custom_call.1} parent=5 // pred_region
        %s303 = ssub.s32 %s17, 2
        // Predicated region
        $region45: #{tpu_custom_call.1} parent=43 // pred_check
          %p304 = pneg %p116
        $region46: #{tpu_custom_call.1} parent=43 // pred_check_branch
          %306 = sbr.rel (%p304) target = $region48
        $region47: #{tpu_custom_call.1} parent=43 // pred_region
          %s307 = sand.u32 %s101, 1
          %s308 = scalar_lea.sflag [#allocation4], %s307
          %s309 = sand.u32 %s101, 1
          %s310 = scalar_lea.vmem [#allocation7], %s309
          %311 = dma.done %s308, 16
        $region48: #{tpu_custom_call.1} parent=43 // pred_fallthru
          _
      $region44: #{tpu_custom_call.1} parent=5 // pred_fallthru
        _
    $region6: #{tpu_custom_call.1} parent=1 // loop_footer
      %s21 = sadd.s32 1, %s17
    $region7: #{tpu_custom_call.1} parent=1 // loop_footer_branch
      %16 = sbr.rel target = $region3
    $region8: #{tpu_custom_call.1} parent=1 // loop_exit
      _
    %312 = vsyncpa [#allocation3], 1
    %s313 = scalar_lea.sflag [#allocation3], 1
    %314 = vsyncpa %s313, 1
    %315 = vsyncpa [#allocation6], 1
    %s316 = scalar_lea.sflag [#allocation6], 1
    %317 = vsyncpa %s316, 1
    %318 = vsyncpa [#allocation4], 1
    %s319 = scalar_lea.sflag [#allocation4], 1
    %320 = vsyncpa %s319, 1

</llo_original>
